<compile_context>
chip_gen: v7x
topology: tpu7x:2x2x1
jax: 0.10.0
libtpu: 0.0.40
codegen_flags: <defaults>
</compile_context>

<pallas_src>
import math
import functools

import jax
import jax.numpy as jnp
from jax.experimental import pallas as pl
from jax.experimental.pallas import tpu as pltpu


def make_pe(max_len: int, d_model: int) -> jnp.ndarray:
    """Deterministic sinusoidal positional-encoding table, same as __init__."""
    position = jnp.arange(0, max_len, dtype=jnp.float32)[:, None]          # (L, 1)
    div_term = jnp.exp(jnp.arange(0, d_model, 2, dtype=jnp.float32)
                       * (-math.log(10000.0) / d_model))                   # (D/2,)
    pe = jnp.zeros((max_len, d_model), dtype=jnp.float32)
    pe = pe.at[:, 0::2].set(jnp.sin(position * div_term))
    pe = pe.at[:, 1::2].set(jnp.cos(position * div_term))
    return pe                                                              # (L, D)


def _lane_replicate_pe(pe_blk, batch):
    # pe_blk: (TS, D) -> (TS, B*D); column c maps to d = c % D, matching the
    # row-major flatten of x from (S, B, D) to (S, B*D). Lane-axis concat only
    # (used only when D % 128 == 0, so it is pure vreg placement).
    if batch == 1:
        return pe_blk
    return jnp.concatenate([pe_blk] * batch, axis=-1)


def _pe_eval_kernel(x_ref, pe_ref, o_ref, *, batch):
    pe_bd = _lane_replicate_pe(pe_ref[...], batch)
    o_ref[...] = (x_ref[...] + pe_bd).astype(o_ref.dtype)


def _pe_train_kernel(seed_ref, x_ref, pe_ref, o_ref, *, batch, keep_thresh, scale):
    pe_bd = _lane_replicate_pe(pe_ref[...], batch)
    y = x_ref[...] + pe_bd
    rows, cols = y.shape

    # Counter-based hash PRNG (splitmix32-style), keyed on (seed, global row,
    # global column) so the mask is deterministic and independent of tiling.
    # Row hash is hoisted to a (rows, 1) vector and the column mix to a
    # (1, cols) vector: per element only ~1 int mul + a few xors/shifts remain.
    # TODO(synk): swap in pltpu.prng_seed/prng_random_bits where the stateful
    # hardware PRNG lowers; the portable hash is kept for robustness here.
    seed_mix = seed_ref[0].astype(jnp.uint32) * jnp.uint32(0x9E3779B9)
    row0 = (pl.program_id(0) * rows).astype(jnp.uint32)
    r = jax.lax.broadcasted_iota(jnp.int32, (rows, 1), 0).astype(jnp.uint32)
    z = (row0 + r) ^ seed_mix
    z = (z ^ (z >> 16)) * jnp.uint32(0x7FEB352D)
    z = (z ^ (z >> 15)) * jnp.uint32(0x846CA68B)
    h_r = z ^ (z >> 16)                                            # (rows, 1)

    c = jax.lax.broadcasted_iota(jnp.int32, (1, cols), 1).astype(jnp.uint32)
    c_h = c * jnp.uint32(0x9E3779B1)                               # (1, cols)

    w = h_r ^ c_h                                                  # (rows, cols)
    w = (w ^ (w >> 15)) * jnp.uint32(0x846CA68B)
    bits = w ^ (w >> 16)

    # Integer-threshold Bernoulli keep + inverted-dropout scaling, computed in
    # x.dtype (no f32 promotion for bf16 inputs).
    keep = bits >= jnp.uint32(keep_thresh)
    scale_v = jnp.asarray(scale, dtype=y.dtype)
    zero_v = jnp.asarray(0, dtype=y.dtype)
    o_ref[...] = (y * jnp.where(keep, scale_v, zero_v)).astype(o_ref.dtype)


def _device_kind() -> str:
    try:
        return jax.devices()[0].device_kind.lower()
    except Exception:
        return ""


def _tile_policy():
    """(x-tile target bytes, vmem_limit_bytes, prefer even block count)."""
    kind = _device_kind()
    if "v7" in kind:
        # 64 MiB VMEM per TC: cap x tiles at ~4 MiB, prefer an even block count
        # so megacore 'parallel' sharding keeps both TensorCores streaming.
        return 4 << 20, 48 << 20, True
    if "v6" in kind:
        # 128 MiB VMEM, 1 TC: go big to amortize per-step overhead.
        return 8 << 20, 96 << 20, False
    # v5e / unknown: scoped default is only 16 MiB -> modest tiles + raised limit.
    return 2 << 20, 32 << 20, False


def _sublane_quantum(itemsize: int) -> int:
    return {4: 8, 2: 16, 1: 32}.get(itemsize, 8)


def _pick_block_rows(S, row_bytes, itemsize, target_bytes, prefer_even_blocks):
    q = _sublane_quantum(itemsize)
    rows = max(1, target_bytes // max(row_bytes, 1))
    if rows >= S:
        return S                                   # single block, no pipelining
    ts = max(q, (rows // q) * q)
    # Prefer a ts that divides S evenly (avoids a ragged, masked last block).
    t = ts
    while t >= q:
        if S % t == 0:
            ts = t
            break
        t -= q
    if prefer_even_blocks:
        nb = pl.cdiv(S, ts)
        if nb > 1 and nb % 2 == 1:
            t = ts - q
            while t >= q:
                if pl.cdiv(S, t) % 2 == 0:
                    ts = t
                    break
                t -= q
    return min(ts, S)


def positional_encoding(x, pe_full, *, dropout_p=0.1, train=False, seed=0,
                        block_rows=None):
    """x: (S, B, D); pe_full: (max_len, D). Matches PositionalEncoding.forward."""
    S, B, D = x.shape
    BD = B * D
    x2 = x.reshape(S, BD)                              # free row-major reshape
    pe = pe_full[:S].astype(x.dtype)                   # pe[:x.size(0)], match dtype

    # Lane-density guard: in-kernel lane concat is only "free" when D % 128 == 0;
    # otherwise pre-replicate pe in the wrapper (small extra HBM traffic).
    if B == 1 or D % 128 == 0:
        pe_in, pe_cols, batch = pe, D, B
    else:
        pe_in, pe_cols, batch = jnp.tile(pe, (1, B)), BD, 1

    itemsize = jnp.dtype(x.dtype).itemsize
    row_bytes = BD * itemsize
    target_bytes, vmem_limit, prefer_even = _tile_policy()
    if block_rows is None:
        ts = _pick_block_rows(S, row_bytes, itemsize, target_bytes, prefer_even)
    else:
        ts = min(block_rows, S)
        if ts < S:
            q = _sublane_quantum(itemsize)
            ts = max(q, (ts // q) * q)
    grid = (pl.cdiv(S, ts),)

    x_spec = pl.BlockSpec((ts, BD), lambda i, *_: (i, 0))
    pe_spec = pl.BlockSpec((ts, pe_cols), lambda i, *_: (i, 0))
    out_spec = pl.BlockSpec((ts, BD), lambda i, *_: (i, 0))
    out_shape = jax.ShapeDtypeStruct((S, BD), x.dtype)
    cparams = pltpu.CompilerParams(dimension_semantics=("parallel",),
                                   vmem_limit_bytes=vmem_limit)

    if train and dropout_p > 0.0:
        keep_thresh = min(2**32 - 1, int(round(dropout_p * (2**32))))
        scale = 1.0 / (1.0 - dropout_p)
        kernel = functools.partial(_pe_train_kernel, batch=batch,
                                   keep_thresh=keep_thresh, scale=scale)
        seed_arr = jnp.asarray([seed], dtype=jnp.int32)
        out2 = pl.pallas_call(
            kernel,
            out_shape=out_shape,
            grid_spec=pltpu.PrefetchScalarGridSpec(
                num_scalar_prefetch=1,                 # seed lands in SMEM
                grid=grid,
                in_specs=[x_spec, pe_spec],
                out_specs=out_spec),
            compiler_params=cparams,
        )(seed_arr, x2, pe_in)
    else:
        # Eval mode (or p == 0): dropout is identity; no dead seed DMA.
        kernel = functools.partial(_pe_eval_kernel, batch=batch)
        out2 = pl.pallas_call(
            kernel,
            out_shape=out_shape,
            grid_spec=pltpu.PrefetchScalarGridSpec(
                num_scalar_prefetch=0,
                grid=grid,
                in_specs=[x_spec, pe_spec],
                out_specs=out_spec),
            compiler_params=cparams,
        )(x2, pe_in)

    return out2.reshape(S, B, D)


if __name__ == "__main__":
    # (seq_len, batch, d_model); B*D = 256 -> lane-dense (multiple of 128) blocks.
    S, B, D = 128, 2, 128
    MAX_LEN = 256    # module default is 5000; small synthetic table here

    key = jax.random.PRNGKey(0)
    x = jax.random.normal(key, (S, B, D), dtype=jnp.float32)
    pe_full = make_pe(MAX_LEN, D)
    ref = x + pe_full[:S][:, None, :]

    # Eval-mode forward (dropout is identity); auto-tiling -> single block here.
    out = jax.block_until_ready(
        positional_encoding(x, pe_full, dropout_p=0.1, train=False))
    assert jnp.allclose(out, ref, atol=1e-6), "mismatch vs reference (eval, 1 block)"

    # Also exercise the tiled / pipelined path explicitly.
    out_t = jax.block_until_ready(
        positional_encoding(x, pe_full, dropout_p=0.1, train=False, block_rows=32))
    assert jnp.allclose(out_t, ref, atol=1e-6), "mismatch vs reference (eval, tiled)"

    # Training-mode dropout: every output element must be 0 or ref/(1-p).
    # TODO(synk): exact torch RNG stream is not reproducible; Bernoulli keep with
    # 1/(1-p) scaling matches nn.Dropout training-mode semantics.
    p = 0.1
    out_tr = jax.block_until_ready(
        positional_encoding(x, pe_full, dropout_p=p, train=True, seed=123))
    scaled = ref * (1.0 / (1.0 - p))
    ok = jnp.all((out_tr == 0.0)
                 | (jnp.abs(out_tr - scaled) <= 1e-5 + 1e-5 * jnp.abs(scaled)))
    assert bool(ok), "dropout output is not {0, scaled-ref} valued"
    drop_rate = float(jnp.mean((out_tr == 0.0).astype(jnp.float32)))
    assert 0.05 <= drop_rate <= 0.2, f"unexpected drop rate {drop_rate}"

    print("KERNEL_OK")
</pallas_src>

<mosaic_0001>
module attributes {stable_mosaic.version = 11 : i64} {
  func.func @_pe_eval_kernel(%arg0: i32, %arg1: memref<128x256xf32, #tpu.memory_space<vmem>>, %arg2: memref<128x128xf32, #tpu.memory_space<vmem>>, %arg3: memref<128x256xf32, #tpu.memory_space<vmem>>) attributes {dimension_semantics = [#tpu.dimension_semantics<parallel>], iteration_bounds = array<i64: 1>, scalar_prefetch = 0 : i64, scratch_operands = 0 : i64, tpu.core_type = #tpu.core_type<tc>, window_params = [{transform_indices = @transform_0, window_bounds = array<i64: 128, 256>}, {transform_indices = @transform_1, window_bounds = array<i64: 128, 128>}, {transform_indices = @transform_2, window_bounds = array<i64: 128, 256>}]} {
    %c0 = arith.constant 0 : index
    %c0_0 = arith.constant 0 : index
    %0 = vector.load %arg2[%c0, %c0_0] : memref<128x128xf32, #tpu.memory_space<vmem>>, vector<128x128xf32>
    %1 = tpu.concatenate %0, %0 in 1 : vector<128x128xf32>, vector<128x128xf32> -> vector<128x256xf32>
    %c0_1 = arith.constant 0 : index
    %c0_2 = arith.constant 0 : index
    %2 = vector.load %arg1[%c0_1, %c0_2] : memref<128x256xf32, #tpu.memory_space<vmem>>, vector<128x256xf32>
    %3 = arith.addf %2, %1 : vector<128x256xf32>
    %c0_3 = arith.constant 0 : index
    %c0_4 = arith.constant 0 : index
    %4 = vector.load %arg3[%c0_3, %c0_4] : memref<128x256xf32, #tpu.memory_space<vmem>>, vector<128x256xf32>
    tpu.vector_store %arg3[%c0_3, %c0_4], %3 {strides = array<i32>} : memref<128x256xf32, #tpu.memory_space<vmem>>, vector<128x256xf32>,
    return
  }
  func.func @transform_0(%arg0: i32) -> (i32, i32) {
    %c0_i32 = arith.constant 0 : i32
    %c0_i32_0 = arith.constant 0 : i32
    return %arg0, %c0_i32 : i32, i32
  }
  func.func @transform_1(%arg0: i32) -> (i32, i32) {
    %c0_i32 = arith.constant 0 : i32
    %c0_i32_0 = arith.constant 0 : i32
    return %arg0, %c0_i32 : i32, i32
  }
  func.func @transform_2(%arg0: i32) -> (i32, i32) {
    %c0_i32 = arith.constant 0 : i32
    %c0_i32_0 = arith.constant 0 : i32
    return %arg0, %c0_i32 : i32, i32
  }
}

</mosaic_0001>

<llo_original>
// kernel: tpu_custom_call.1
$region0: #{tpu_custom_call.1}
  #allocation0 [shape = 'u32[]', space=smem, size = 0x4, offset = 0x4, fixed_abs, tag = 'smem constant byte address 0x4 - core index']
  #allocation1 [shape = 'u32[144,128]{1,0:T(1,128)}', space=vmem, size = 0x12000, scoped, tag = 'internal scratch']
  %s0 = inlined_call_operand.hbm [shape: f32[128,256], index: 0, kind: input, shape index: {}]
  %s1 = inlined_call_operand.hbm [shape: f32[128,128], index: 1, kind: input, shape index: {}]
  %s2 = inlined_call_operand.hbm [shape: f32[128,256], index: 2, kind: output, shape index: {}]
  %s3 = sld [smem:[#allocation0]]
  $region26: #{tpu_custom_call.1} parent=0
    _
  %s5 = ssub.s32 1, %s3
  %s6 = scalar_select 0, %s5, %s3
  $region1: #{tpu_custom_call.1} parent=0
    #allocation2 [shape = 'u8[131072]{0}', space=vmem, size = 0x20000, scoped, tag = 'input window, operand 0, single buffered']
    #allocation3 [shape = 's32[1]{0}', space=sflag, size = 0x4, scoped, tag = 'scoped memory for tpu_custom_call.1']
    #allocation4 [shape = 's32[1]{0}', space=sflag, size = 0x4, scoped, tag = 'scoped memory for tpu_custom_call.1']
    #allocation5 [shape = 'u8[65536]{0}', space=vmem, size = 0x10000, scoped, tag = 'input window, operand 1, single buffered']
    #allocation6 [shape = 's32[1]{0}', space=sflag, size = 0x4, scoped, tag = 'scoped memory for tpu_custom_call.1']
    #allocation7 [shape = 'u8[131072]{0}', space=vmem, size = 0x20000, scoped, tag = 'output window, operand 0, single buffered']
    %7 = vsyncpa [#allocation3], 0
    %8 = vsyncpa [#allocation6], 0
    %9 = vsyncpa [#allocation4], 0
    // Predicated region
    $region2: #{tpu_custom_call.1} parent=1 // pred_check
      _
    $region3: #{tpu_custom_call.1} parent=1 // pred_check_branch
      %11 = sbr.rel (0) target = $region5
    $region4: #{tpu_custom_call.1} parent=1 // pred_region
      %s13 = ssub.s32 4096, 4096
      %14 = vsyncadd [#allocation3], %s13
      %s15 = sshll.u32 [#allocation2], 4
      %s16 = int_to_ptr.vmem [resolvable:$true] %s15
      %21 = dma.hbm_to_vmem [thread:$0]  %s0, 4096, %s16, [#allocation3], 256, 256, 16
    $region5: #{tpu_custom_call.1} parent=1 // pred_fallthru
      _
    // Predicated region
    $region6: #{tpu_custom_call.1} parent=1 // pred_check
      _
    $region7: #{tpu_custom_call.1} parent=1 // pred_check_branch
      %23 = sbr.rel (0) target = $region9
    $region8: #{tpu_custom_call.1} parent=1 // pred_region
      %s25 = ssub.s32 2048, 2048
      %26 = vsyncadd [#allocation6], %s25
      %s27 = sshll.u32 [#allocation5], 4
      %s28 = int_to_ptr.vmem [resolvable:$true] %s27
      %33 = dma.hbm_to_vmem [thread:$0]  %s1, 2048, %s28, [#allocation6], 128, 128, 8
    $region9: #{tpu_custom_call.1} parent=1 // pred_fallthru
      _
    // Predicated region
    $region10: #{tpu_custom_call.1} parent=1 // pred_check
      _
    $region11: #{tpu_custom_call.1} parent=1 // pred_check_branch
      %35 = sbr.rel (0) target = $region13
    $region12: #{tpu_custom_call.1} parent=1 // pred_region
      %36 = dma.done [#allocation3], 4096
    $region13: #{tpu_custom_call.1} parent=1 // pred_fallthru
      _
    // Predicated region
    $region14: #{tpu_custom_call.1} parent=1 // pred_check
      _
    $region15: #{tpu_custom_call.1} parent=1 // pred_check_branch
      %38 = sbr.rel (0) target = $region17
    $region16: #{tpu_custom_call.1} parent=1 // pred_region
      %39 = dma.done [#allocation6], 2048
    $region17: #{tpu_custom_call.1} parent=1 // pred_fallthru
      _
    %v40 = vld [vmem:[#allocation5] sm:$0xff]
    %v41 = vld [vmem:[#allocation5 + $0x8] sm:$0xff]
    %v42 = vld [vmem:[#allocation5 + $0x10] sm:$0xff]
    %v43 = vld [vmem:[#allocation5 + $0x18] sm:$0xff]
    %v44 = vld [vmem:[#allocation5 + $0x20] sm:$0xff]
    %v45 = vld [vmem:[#allocation5 + $0x28] sm:$0xff]
    %v46 = vld [vmem:[#allocation5 + $0x30] sm:$0xff]
    %v47 = vld [vmem:[#allocation5 + $0x38] sm:$0xff]
    %v48 = vld [vmem:[#allocation5 + $0x40] sm:$0xff]
    %v49 = vld [vmem:[#allocation5 + $0x48] sm:$0xff]
    %v50 = vld [vmem:[#allocation5 + $0x50] sm:$0xff]
    %v51 = vld [vmem:[#allocation5 + $0x58] sm:$0xff]
    %v52 = vld [vmem:[#allocation5 + $0x60] sm:$0xff]
    %v53 = vld [vmem:[#allocation5 + $0x68] sm:$0xff]
    %v54 = vld [vmem:[#allocation5 + $0x70] sm:$0xff]
    %v55 = vld [vmem:[#allocation5 + $0x78] sm:$0xff]
    %v56 = vld [vmem:[#allocation2] sm:$0xff]
    %v57 = vld [vmem:[#allocation2 + $0x8] sm:$0xff]
    %v58 = vld [vmem:[#allocation2 + $0x10] sm:$0xff]
    %v59 = vld [vmem:[#allocation2 + $0x18] sm:$0xff]
    %v60 = vld [vmem:[#allocation2 + $0x20] sm:$0xff]
    %v61 = vld [vmem:[#allocation2 + $0x28] sm:$0xff]
    %v62 = vld [vmem:[#allocation2 + $0x30] sm:$0xff]
    %v63 = vld [vmem:[#allocation2 + $0x38] sm:$0xff]
    %v64 = vld [vmem:[#allocation2 + $0x40] sm:$0xff]
    %v65 = vld [vmem:[#allocation2 + $0x48] sm:$0xff]
    %v66 = vld [vmem:[#allocation2 + $0x50] sm:$0xff]
    %v67 = vld [vmem:[#allocation2 + $0x58] sm:$0xff]
    %v68 = vld [vmem:[#allocation2 + $0x60] sm:$0xff]
    %v69 = vld [vmem:[#allocation2 + $0x68] sm:$0xff]
    %v70 = vld [vmem:[#allocation2 + $0x70] sm:$0xff]
    %v71 = vld [vmem:[#allocation2 + $0x78] sm:$0xff]
    %v72 = vld [vmem:[#allocation2 + $0x80] sm:$0xff]
    %v73 = vld [vmem:[#allocation2 + $0x88] sm:$0xff]
    %v74 = vld [vmem:[#allocation2 + $0x90] sm:$0xff]
    %v75 = vld [vmem:[#allocation2 + $0x98] sm:$0xff]
    %v76 = vld [vmem:[#allocation2 + $0xa0] sm:$0xff]
    %v77 = vld [vmem:[#allocation2 + $0xa8] sm:$0xff]
    %v78 = vld [vmem:[#allocation2 + $0xb0] sm:$0xff]
    %v79 = vld [vmem:[#allocation2 + $0xb8] sm:$0xff]
    %v80 = vld [vmem:[#allocation2 + $0xc0] sm:$0xff]
    %v81 = vld [vmem:[#allocation2 + $0xc8] sm:$0xff]
    %v82 = vld [vmem:[#allocation2 + $0xd0] sm:$0xff]
    %v83 = vld [vmem:[#allocation2 + $0xd8] sm:$0xff]
    %v84 = vld [vmem:[#allocation2 + $0xe0] sm:$0xff]
    %v85 = vld [vmem:[#allocation2 + $0xe8] sm:$0xff]
    %v86 = vld [vmem:[#allocation2 + $0xf0] sm:$0xff]
    %v87 = vld [vmem:[#allocation2 + $0xf8] sm:$0xff]
    %v88 = vadd.f32 %v56, %v40
    %v89 = vadd.f32 %v57, %v40
    %v90 = vadd.f32 %v58, %v41
    %v91 = vadd.f32 %v59, %v41
    %v92 = vadd.f32 %v60, %v42
    %v93 = vadd.f32 %v61, %v42
    %v94 = vadd.f32 %v62, %v43
    %v95 = vadd.f32 %v63, %v43
    %v96 = vadd.f32 %v64, %v44
    %v97 = vadd.f32 %v65, %v44
    %v98 = vadd.f32 %v66, %v45
    %v99 = vadd.f32 %v67, %v45
    %v100 = vadd.f32 %v68, %v46
    %v101 = vadd.f32 %v69, %v46
    %v102 = vadd.f32 %v70, %v47
    %v103 = vadd.f32 %v71, %v47
    %v104 = vadd.f32 %v72, %v48
    %v105 = vadd.f32 %v73, %v48
    %v106 = vadd.f32 %v74, %v49
    %v107 = vadd.f32 %v75, %v49
    %v108 = vadd.f32 %v76, %v50
    %v109 = vadd.f32 %v77, %v50
    %v110 = vadd.f32 %v78, %v51
    %v111 = vadd.f32 %v79, %v51
    %v112 = vadd.f32 %v80, %v52
    %v113 = vadd.f32 %v81, %v52
    %v114 = vadd.f32 %v82, %v53
    %v115 = vadd.f32 %v83, %v53
    %v116 = vadd.f32 %v84, %v54
    %v117 = vadd.f32 %v85, %v54
    %v118 = vadd.f32 %v86, %v55
    %v119 = vadd.f32 %v87, %v55
    %120 = vst [vmem:[#allocation7] sm:$0xff] %v88
    %121 = vst [vmem:[#allocation7 + $0x8] sm:$0xff] %v89
    %122 = vst [vmem:[#allocation7 + $0x10] sm:$0xff] %v90
    %123 = vst [vmem:[#allocation7 + $0x18] sm:$0xff] %v91
    %124 = vst [vmem:[#allocation7 + $0x20] sm:$0xff] %v92
    %125 = vst [vmem:[#allocation7 + $0x28] sm:$0xff] %v93
    %126 = vst [vmem:[#allocation7 + $0x30] sm:$0xff] %v94
    %127 = vst [vmem:[#allocation7 + $0x38] sm:$0xff] %v95
    %128 = vst [vmem:[#allocation7 + $0x40] sm:$0xff] %v96
    %129 = vst [vmem:[#allocation7 + $0x48] sm:$0xff] %v97
    %130 = vst [vmem:[#allocation7 + $0x50] sm:$0xff] %v98
    %131 = vst [vmem:[#allocation7 + $0x58] sm:$0xff] %v99
    %132 = vst [vmem:[#allocation7 + $0x60] sm:$0xff] %v100
    %133 = vst [vmem:[#allocation7 + $0x68] sm:$0xff] %v101
    %134 = vst [vmem:[#allocation7 + $0x70] sm:$0xff] %v102
    %135 = vst [vmem:[#allocation7 + $0x78] sm:$0xff] %v103
    %136 = vst [vmem:[#allocation7 + $0x80] sm:$0xff] %v104
    %137 = vst [vmem:[#allocation7 + $0x88] sm:$0xff] %v105
    %138 = vst [vmem:[#allocation7 + $0x90] sm:$0xff] %v106
    %139 = vst [vmem:[#allocation7 + $0x98] sm:$0xff] %v107
    %140 = vst [vmem:[#allocation7 + $0xa0] sm:$0xff] %v108
    %141 = vst [vmem:[#allocation7 + $0xa8] sm:$0xff] %v109
    %142 = vst [vmem:[#allocation7 + $0xb0] sm:$0xff] %v110
    %143 = vst [vmem:[#allocation7 + $0xb8] sm:$0xff] %v111
    %144 = vst [vmem:[#allocation7 + $0xc0] sm:$0xff] %v112
    %145 = vst [vmem:[#allocation7 + $0xc8] sm:$0xff] %v113
    %146 = vst [vmem:[#allocation7 + $0xd0] sm:$0xff] %v114
    %147 = vst [vmem:[#allocation7 + $0xd8] sm:$0xff] %v115
    %148 = vst [vmem:[#allocation7 + $0xe0] sm:$0xff] %v116
    %149 = vst [vmem:[#allocation7 + $0xe8] sm:$0xff] %v117
    %150 = vst [vmem:[#allocation7 + $0xf0] sm:$0xff] %v118
    %151 = vst [vmem:[#allocation7 + $0xf8] sm:$0xff] %v119
    // Predicated region
    $region18: #{tpu_custom_call.1} parent=1 // pred_check
      _
    $region19: #{tpu_custom_call.1} parent=1 // pred_check_branch
      %153 = sbr.rel (0) target = $region21
    $region20: #{tpu_custom_call.1} parent=1 // pred_region
      %s155 = ssub.s32 4096, 4096
      %156 = vsyncadd [#allocation4], %s155
      %s157 = sshll.u32 [#allocation7], 4
      %s158 = int_to_ptr.vmem [resolvable:$true] %s157
      %163 = dma.vmem_to_hbm [thread:$0]  %s158, 4096, %s2, [#allocation4], 256, 256, 16
    $region21: #{tpu_custom_call.1} parent=1 // pred_fallthru
      _
    // Predicated region
    $region22: #{tpu_custom_call.1} parent=1 // pred_check
      _
    $region23: #{tpu_custom_call.1} parent=1 // pred_check_branch
      %165 = sbr.rel (0) target = $region25
    $region24: #{tpu_custom_call.1} parent=1 // pred_region
      %166 = dma.done [#allocation4], 4096
    $region25: #{tpu_custom_call.1} parent=1 // pred_fallthru
      _
    %167 = vsyncpa [#allocation3], 1
    %168 = vsyncpa [#allocation6], 1
    %169 = vsyncpa [#allocation4], 1

</llo_original>
